<compile_context>
chip_gen: v7x
topology: tpu7x:2x2x1
jax: 0.10.0
libtpu: 0.0.40
codegen_flags: <defaults>
</compile_context>

<pallas_src>
import functools

import jax
import jax.numpy as jnp
from jax.experimental import pallas as pl
from jax.experimental.pallas import tpu as pltpu


def _attention_gate_kernel(g_ref, x_ref, wg_ref, wx_ref, wpsi_ref, c_ref, o_ref):
    """One (channels, tile_m) slab of the attention gate.

    g_ref:    (F_g, TM)     gating tile   (channels on sublanes, M on lanes)
    x_ref:    (F_l, TM)     skip tile
    wg_ref:   (F_int, F_g)  1x1 conv weight W_g  (PyTorch (out, in) layout)
    wx_ref:   (F_int, F_l)  1x1 conv weight W_x
    wpsi_ref: (F_int, 1)    psi conv weight as a column
    c_ref:    (1, 1) SMEM   scalar = wpsi @ (b_g + b_x) + b_psi
    o_ref:    (F_l, TM)
    """
    g = g_ref[...]
    x = x_ref[...]

    # 1x1 convs == channel matmuls (MXU, f32 accumulation). If inputs/weights
    # are bf16 they are fed to the MXU directly (astype is a no-op for matching
    # dtypes); only the accumulator / elementwise path is f32 (v5e-safe).
    g1 = jnp.dot(wg_ref[...], g.astype(wg_ref.dtype),
                 preferred_element_type=jnp.float32)
    x1 = jnp.dot(wx_ref[...], x.astype(wx_ref.dtype),
                 preferred_element_type=jnp.float32)
    s = g1 + x1                                             # (F_int, TM) f32

    # psi: Conv2d(F_int, 1, 1x1).  Width-1 matmul -> VPU multiply + sublane
    # reduction (XLU slot is otherwise idle here).  Biases already folded to c.
    logits = jnp.sum(s * wpsi_ref[...].astype(jnp.float32),
                     axis=0, keepdims=True) + c_ref[0, 0]   # (1, TM)
    psi = jax.nn.sigmoid(logits)                            # f32 elementwise

    o_ref[...] = (x.astype(jnp.float32) * psi).astype(o_ref.dtype)


def _choose_tile_m(HW, F_g, F_l, n_batch, itemsize, max_tile_m,
                   tile_vmem_budget=24 << 20):
    """Largest lane tile that keeps double-buffered g/x/out tiles in budget."""
    if HW <= max_tile_m:
        return int(HW)                      # full-extent block (always legal)
    per_m = 2 * (F_g + 2 * F_l) * max(itemsize, 4)   # 2 buffers x (g + x + out)
    tm = min(max_tile_m, tile_vmem_budget // per_m)
    tm = max(128, (tm // 128) * 128)
    # v7x has 2 TensorCores sharing HBM; keep >= 4 parallel grid steps.
    while n_batch * (-(-HW // tm)) < 4 and tm > 512:
        tm = max(512, (tm // 2 // 128) * 128)
    return int(tm)


@functools.partial(jax.jit, static_argnames=("max_tile_m",))
def attention_gate(g, x, params, max_tile_m=2048):
    """g: (N, F_g, H, W), x: (N, F_l, H, W)  (NCHW, like PyTorch).

    Returns x * sigmoid(psi(W_g(g) + W_x(x))) with shape (N, F_l, H, W).
    """
    wg, bg, wx, bx, wpsi, bpsi = (params[k] for k in
                                  ("wg", "bg", "wx", "bx", "wpsi", "bpsi"))
    N, F_g, H, W = g.shape
    F_l = x.shape[1]
    F_int = wg.shape[0]
    HW = H * W

    # Free reshapes (no transpose, no HBM pass): channels stay on sublanes.
    g3 = g.reshape(N, F_g, HW)
    x3 = x.reshape(N, F_l, HW)

    # Fold all conv biases into one scalar (exact, psi conv is linear).
    c = (jnp.dot(wpsi[:, 0].astype(jnp.float32),
                 (bg + bx).astype(jnp.float32))
         + jnp.sum(bpsi.astype(jnp.float32))).reshape(1, 1)

    tile_m = _choose_tile_m(HW, F_g, F_l, N, x.dtype.itemsize, max_tile_m)
    grid = (N, pl.cdiv(HW, tile_m))  # ragged last block handled by Pallas

    flops = 2 * N * HW * F_int * (F_g + F_l + 1)
    bytes_accessed = (g3.size * g3.dtype.itemsize
                      + 2 * x3.size * x3.dtype.itemsize
                      + wg.size * wg.dtype.itemsize
                      + wx.size * wx.dtype.itemsize
                      + wpsi.size * wpsi.dtype.itemsize)

    out3 = pl.pallas_call(
        _attention_gate_kernel,
        out_shape=jax.ShapeDtypeStruct((N, F_l, HW), x.dtype),
        grid_spec=pltpu.PrefetchScalarGridSpec(
            num_scalar_prefetch=0,
            grid=grid,
            in_specs=[
                pl.BlockSpec((None, F_g, tile_m), lambda n, i: (n, 0, i)),  # g
                pl.BlockSpec((None, F_l, tile_m), lambda n, i: (n, 0, i)),  # x
                pl.BlockSpec((F_int, F_g), lambda n, i: (0, 0)),            # W_g
                pl.BlockSpec((F_int, F_l), lambda n, i: (0, 0)),            # W_x
                pl.BlockSpec((F_int, 1), lambda n, i: (0, 0)),              # W_psi
                pl.BlockSpec(memory_space=pltpu.MemorySpace.SMEM),          # c
            ],
            out_specs=pl.BlockSpec((None, F_l, tile_m), lambda n, i: (n, 0, i)),
        ),
        compiler_params=pltpu.CompilerParams(
            dimension_semantics=("parallel", "parallel"),
            vmem_limit_bytes=48 * 1024 * 1024,
        ),
        cost_estimate=pl.CostEstimate(
            flops=flops, transcendentals=N * HW, bytes_accessed=bytes_accessed),
    )(g3, x3, wg, wx, wpsi, c)

    return out3.reshape(N, F_l, H, W)


def init_params(key, F_g, F_l, F_int, dtype=jnp.float32):
    """Deterministic synthetic init matching Conv2d(1x1) parameter shapes.

    Weights stored in PyTorch (out, in) layout (1x1 squeezed); psi weight kept
    as a column (F_int, 1) for the kernel.
    """
    ks = jax.random.split(key, 6)

    def u(k, shape, fan_in):
        bound = 1.0 / (fan_in ** 0.5)
        return jax.random.uniform(k, shape, dtype, -bound, bound)

    return dict(
        wg=u(ks[0], (F_int, F_g), F_g),
        bg=u(ks[1], (F_int,), F_g),
        wx=u(ks[2], (F_int, F_l), F_l),
        bx=u(ks[3], (F_int,), F_l),
        wpsi=u(ks[4], (F_int, 1), F_int),
        bpsi=u(ks[5], (1,), F_int),
    )


def _reference(g, x, p):
    """Pure-JAX reference (NCHW) mirroring the PyTorch forward exactly."""
    g2 = jnp.transpose(g, (0, 2, 3, 1))              # NHWC
    x2 = jnp.transpose(x, (0, 2, 3, 1))
    g1 = g2 @ p["wg"].T + p["bg"]
    x1 = x2 @ p["wx"].T + p["bx"]
    psi = jax.nn.sigmoid((g1 + x1) @ p["wpsi"] + p["bpsi"])
    out = x2 * psi
    return jnp.transpose(out, (0, 3, 1, 2))


if __name__ == "__main__":
    N, F_g, F_l, F_int, H, W = 2, 4, 4, 8, 16, 16
    key = jax.random.PRNGKey(0)
    kg, kx, kp = jax.random.split(key, 3)
    g = jax.random.normal(kg, (N, F_g, H, W), jnp.float32)
    x = jax.random.normal(kx, (N, F_l, H, W), jnp.float32)
    params = init_params(kp, F_g, F_l, F_int)

    out = jax.block_until_ready(attention_gate(g, x, params))

    ref = _reference(g, x, params)
    assert out.shape == (N, F_l, H, W), out.shape
    assert jnp.allclose(out, ref, atol=1e-5, rtol=1e-5), float(
        jnp.max(jnp.abs(out - ref)))
    print("KERNEL_OK")
</pallas_src>

<mosaic_0001>
module attributes {stable_mosaic.version = 11 : i64} {
  func.func @_attention_gate_kernel(%arg0: i32, %arg1: i32, %arg2: memref<1x4x256xf32, #tpu.memory_space<vmem>>, %arg3: memref<1x4x256xf32, #tpu.memory_space<vmem>>, %arg4: memref<8x4xf32, #tpu.memory_space<vmem>>, %arg5: memref<8x4xf32, #tpu.memory_space<vmem>>, %arg6: memref<8x1xf32, #tpu.memory_space<vmem>>, %arg7: memref<1x1xf32, #tpu.memory_space<smem>>, %arg8: memref<1x4x256xf32, #tpu.memory_space<vmem>>) attributes {dimension_semantics = [#tpu.dimension_semantics<parallel>, #tpu.dimension_semantics<parallel>], iteration_bounds = array<i64: 2, 1>, scalar_prefetch = 0 : i64, scratch_operands = 0 : i64, tpu.core_type = #tpu.core_type<tc>, window_params = [{transform_indices = @transform_0, window_bounds = array<i64: 1, 4, 256>}, {transform_indices = @transform_1, window_bounds = array<i64: 1, 4, 256>}, {pipeline_mode = #tpu.pipeline_mode<synchronous>, transform_indices = @transform_2, window_bounds = array<i64: 8, 4>}, {pipeline_mode = #tpu.pipeline_mode<synchronous>, transform_indices = @transform_3, window_bounds = array<i64: 8, 4>}, {pipeline_mode = #tpu.pipeline_mode<synchronous>, transform_indices = @transform_4, window_bounds = array<i64: 8, 1>}, {transform_indices = @transform_5, window_bounds = array<i64: 1, 1>}, {transform_indices = @transform_6, window_bounds = array<i64: 1, 4, 256>}]} {
    %c0 = arith.constant 0 : index
    %c0_0 = arith.constant 0 : index
    %c0_1 = arith.constant 0 : index
    %0 = vector.load %arg2[%c0, %c0_0, %c0_1] : memref<1x4x256xf32, #tpu.memory_space<vmem>>, vector<1x4x256xf32>
    %1 = vector.shape_cast %0 : vector<1x4x256xf32> to vector<4x256xf32>
    %c0_2 = arith.constant 0 : index
    %c0_3 = arith.constant 0 : index
    %c0_4 = arith.constant 0 : index
    %2 = vector.load %arg3[%c0_2, %c0_3, %c0_4] : memref<1x4x256xf32, #tpu.memory_space<vmem>>, vector<1x4x256xf32>
    %3 = vector.shape_cast %2 : vector<1x4x256xf32> to vector<4x256xf32>
    %c0_5 = arith.constant 0 : index
    %c0_6 = arith.constant 0 : index
    %4 = vector.load %arg4[%c0_5, %c0_6] : memref<8x4xf32, #tpu.memory_space<vmem>>, vector<8x4xf32>
    %cst = arith.constant dense<0.000000e+00> : vector<8x256xf32>
    %5 = tpu.matmul %4, %1, %cst {dimension_numbers = #tpu.dot_dimension_numbers<[1], [0], [0], [1], [0, 0, 1, 1], [], []>} : vector<8x4xf32>, vector<4x256xf32>, vector<8x256xf32> -> vector<8x256xf32>
    %c0_7 = arith.constant 0 : index
    %c0_8 = arith.constant 0 : index
    %6 = vector.load %arg5[%c0_7, %c0_8] : memref<8x4xf32, #tpu.memory_space<vmem>>, vector<8x4xf32>
    %cst_9 = arith.constant dense<0.000000e+00> : vector<8x256xf32>
    %7 = tpu.matmul %6, %3, %cst_9 {dimension_numbers = #tpu.dot_dimension_numbers<[1], [0], [0], [1], [0, 0, 1, 1], [], []>} : vector<8x4xf32>, vector<4x256xf32>, vector<8x256xf32> -> vector<8x256xf32>
    %8 = arith.addf %5, %7 : vector<8x256xf32>
    %c0_10 = arith.constant 0 : index
    %c0_11 = arith.constant 0 : index
    %9 = vector.load %arg6[%c0_10, %c0_11] : memref<8x1xf32, #tpu.memory_space<vmem>>, vector<8x1xf32>
    %10 = vector.broadcast %9 : vector<8x1xf32> to vector<8x256xf32>
    %11 = arith.mulf %8, %10 : vector<8x256xf32>
    %cst_12 = arith.constant dense<0.000000e+00> : vector<256xf32>
    %12 = vector.multi_reduction <add>, %11, %cst_12 [0] : vector<8x256xf32> to vector<256xf32>
    %13 = vector.shape_cast %12 : vector<256xf32> to vector<1x256xf32>
    %c0_13 = arith.constant 0 : index
    %c0_14 = arith.constant 0 : index
    %14 = memref.load %arg7[%c0_13, %c0_14] : memref<1x1xf32, #tpu.memory_space<smem>>
    %15 = vector.broadcast %14 : f32 to vector<1x256xf32>
    %16 = arith.addf %13, %15 : vector<1x256xf32>
    %17 = arith.negf %16 : vector<1x256xf32>
    %18 = math.exp %17 : vector<1x256xf32>
    %cst_15 = arith.constant 1.000000e+00 : f32
    %19 = vector.broadcast %cst_15 : f32 to vector<1x256xf32>
    %20 = arith.addf %19, %18 : vector<1x256xf32>
    %21 = arith.divf %19, %20 : vector<1x256xf32>
    %22 = vector.broadcast %21 : vector<1x256xf32> to vector<4x256xf32>
    %23 = arith.mulf %3, %22 : vector<4x256xf32>
    %c0_16 = arith.constant 0 : index
    %c0_17 = arith.constant 0 : index
    %c0_18 = arith.constant 0 : index
    %24 = vector.load %arg8[%c0_16, %c0_17, %c0_18] : memref<1x4x256xf32, #tpu.memory_space<vmem>>, vector<1x4x256xf32>
    %25 = vector.shape_cast %24 : vector<1x4x256xf32> to vector<4x256xf32>
    %26 = vector.shape_cast %23 : vector<4x256xf32> to vector<1x4x256xf32>
    tpu.vector_store %arg8[%c0_16, %c0_17, %c0_18], %26 {strides = array<i32>} : memref<1x4x256xf32, #tpu.memory_space<vmem>>, vector<1x4x256xf32>,
    return
  }
  func.func @transform_0(%arg0: i32, %arg1: i32) -> (i32, i32, i32) {
    %c0_i32 = arith.constant 0 : i32
    %c0_i32_0 = arith.constant 0 : i32
    return %arg0, %c0_i32, %arg1 : i32, i32, i32
  }
  func.func @transform_1(%arg0: i32, %arg1: i32) -> (i32, i32, i32) {
    %c0_i32 = arith.constant 0 : i32
    %c0_i32_0 = arith.constant 0 : i32
    return %arg0, %c0_i32, %arg1 : i32, i32, i32
  }
  func.func @transform_2(%arg0: i32, %arg1: i32) -> (i32, i32) {
    %c0_i32 = arith.constant 0 : i32
    %c0_i32_0 = arith.constant 0 : i32
    %c0_i32_1 = arith.constant 0 : i32
    return %c0_i32, %c0_i32_0 : i32, i32
  }
  func.func @transform_3(%arg0: i32, %arg1: i32) -> (i32, i32) {
    %c0_i32 = arith.constant 0 : i32
    %c0_i32_0 = arith.constant 0 : i32
    %c0_i32_1 = arith.constant 0 : i32
    return %c0_i32, %c0_i32_0 : i32, i32
  }
  func.func @transform_4(%arg0: i32, %arg1: i32) -> (i32, i32) {
    %c0_i32 = arith.constant 0 : i32
    %c0_i32_0 = arith.constant 0 : i32
    %c0_i32_1 = arith.constant 0 : i32
    return %c0_i32, %c0_i32_0 : i32, i32
  }
  func.func @transform_5(%arg0: i32, %arg1: i32) -> (i32, i32) {
    %c0_i32 = arith.constant 0 : i32
    %c0_i32_0 = arith.constant 0 : i32
    %c0_i32_1 = arith.constant 0 : i32
    return %c0_i32, %c0_i32_0 : i32, i32
  }
  func.func @transform_6(%arg0: i32, %arg1: i32) -> (i32, i32, i32) {
    %c0_i32 = arith.constant 0 : i32
    %c0_i32_0 = arith.constant 0 : i32
    return %arg0, %c0_i32, %arg1 : i32, i32, i32
  }
}

</mosaic_0001>

<llo_original>
// kernel: attention_gate.1
$region0: #{attention_gate.1}
  #allocation0 [shape = 'u32[]', space=smem, size = 0x4, offset = 0x4, fixed_abs, tag = 'smem constant byte address 0x4 - core index']
  #allocation1 [shape = 'u32[144,128]{1,0:T(1,128)}', space=vmem, size = 0x12000, scoped, tag = 'internal scratch']
  #allocation2 [shape = 'f32[1,1]{1,0:T(1,128)S(6)}', space=smem, size = 0x200, scoped, tag = 'scoped memory for attention_gate.1']
  %s0 = inlined_call_operand.vmem [shape: f32[2,4,256], index: 0, kind: input, shape index: {}]
  %s1 = inlined_call_operand.vmem [shape: f32[2,4,256], index: 1, kind: input, shape index: {}]
  %s2 = inlined_call_operand.vmem [shape: f32[8,4], index: 2, kind: input, shape index: {}]
  %s3 = inlined_call_operand.vmem [shape: f32[8,4], index: 3, kind: input, shape index: {}]
  %s4 = inlined_call_operand.vmem [shape: f32[8,1], index: 4, kind: input, shape index: {}]
  %s5 = inlined_call_operand.<no memory space> [shape: f32[1,1], index: 5, kind: input, shape index: {}]
  %s6 = inlined_call_operand.vmem [shape: f32[2,4,256], index: 6, kind: output, shape index: {}]
  %s7 = sld [smem:[#allocation0]]
  $region57: #{attention_gate.1} parent=0
    _
  %s9 = ssub.s32 1, %s7
  %s10 = scalar_select 0, %s9, %s7
  %11 = sst [smem:[#allocation2]] %s5
  loop: start=0, step=1, limit=4
  $region2: #{attention_gate.1} parent=0 // loop_pre_header
    _
  $region3: #{attention_gate.1} parent=0 // loop_header
    %s13 = sphi 0, %s17
    %p14 = scmp.ge.s32.totalorder %s13, 4
    %s20 = sphi 0, %s32
    %s21 = sphi 0, %s28
    %s22 = sphi 0, %s20
    %s23 = sphi 0, %s21
    %s24 = sphi 0, %s22
    %s25 = sphi 0, %s23
    %s37 = sphi 0, %s39
    %s40 = sphi 0, %s37
    %s41 = sphi 0, %s40
    %s57 = sphi 0, %s41
    %s65 = sphi 0, %s67
    %s68 = sphi 0, %s65
    %s69 = sphi 0, %s68
    %s85 = sphi 0, %s69
    %s89 = sphi 0, %s89
    %s91 = sphi 0, %s89
    %s92 = sphi 0, %s91
    %s106 = sphi 0, %s92
    %s110 = sphi 0, %s110
    %s112 = sphi 0, %s110
    %s113 = sphi 0, %s112
    %s127 = sphi 0, %s113
    %s131 = sphi 0, %s131
    %s133 = sphi 0, %s131
    %s134 = sphi 0, %s133
    %s148 = sphi 0, %s134
    %s152 = sphi 0, %s152
    %s154 = sphi 0, %s152
    %s155 = sphi 0, %s154
    %s169 = sphi 0, %s155
    %s177 = sphi 0, %s179
    %s180 = sphi 0, %s177
    %s181 = sphi 0, %s180
    %s197 = sphi 0, %s181
  $region4: #{attention_gate.1} parent=0 // loop_header_branch
    %16 = sbr.rel (%p14) target = $region8
  $region5: #{attention_gate.1} parent=0 // loop_body
    %s18 = ssub.s32 %s13, 1
    %s19 = ssub.s32 %s13, 2
    %s26 = sadd.s32 1, %s21
    %p27 = scmp.ge.s32.totalorder %s26, 1
    %s28 = scalar_select %p27, 0, %s26
    %s29 = sadd.s32 1, %s20
    %s30 = scalar_select %p27, %s29, %s20
    %p31 = scmp.ge.s32.totalorder %s30, 2
    %s32 = scalar_select %p31, 0, %s30
    %s33 = ssub.s32 %s20, %s32
    %s34 = ssub.s32 %s21, %s28
    %s35 = sor.u32 %s33, %s34
    %p36 = scmp.eq.s32.totalorder %s35, 0
    %s38 = sadd.s32 %s37, 1
    %s39 = scalar_select %p36, %s37, %s38
    %p42 = pneg %p36
    %p43 = scmp.eq.s32.totalorder %s13, 1
    %p44 = por %p42, %p43
    %p45 = scmp.ne.s32.totalorder %s37, %s40
    %p46 = scmp.eq.s32.totalorder %s13, 0
    %p47 = por %p45, %p46
    %p48 = scmp.ne.s32.totalorder %s37, %s40
    %p49 = scmp.eq.s32.totalorder %s18, 1
    %p50 = por %p48, %p49
    %p51 = scmp.ne.s32.totalorder %s40, %s41
    %p52 = scmp.eq.s32.totalorder %s18, 0
    %p53 = por %p51, %p52
    %p54 = scmp.ne.s32.totalorder %s40, %s41
    %p55 = scmp.eq.s32.totalorder %s19, 1
    %p56 = por %p54, %p55
    %p58 = scmp.ne.s32.totalorder %s41, %s57
    %p59 = scmp.eq.s32.totalorder %s19, 0
    %p60 = por %p58, %p59
    %s61 = ssub.s32 %s20, %s32
    %s62 = ssub.s32 %s21, %s28
    %s63 = sor.u32 %s61, %s62
    %p64 = scmp.eq.s32.totalorder %s63, 0
    %s66 = sadd.s32 %s65, 1
    %s67 = scalar_select %p64, %s65, %s66
    %p70 = pneg %p64
    %p71 = scmp.eq.s32.totalorder %s13, 1
    %p72 = por %p70, %p71
    %p73 = scmp.ne.s32.totalorder %s65, %s68
    %p74 = scmp.eq.s32.totalorder %s13, 0
    %p75 = por %p73, %p74
    %p76 = scmp.ne.s32.totalorder %s65, %s68
    %p77 = scmp.eq.s32.totalorder %s18, 1
    %p78 = por %p76, %p77
    %p79 = scmp.ne.s32.totalorder %s68, %s69
    %p80 = scmp.eq.s32.totalorder %s18, 0
    %p81 = por %p79, %p80
    %p82 = scmp.ne.s32.totalorder %s68, %s69
    %p83 = scmp.eq.s32.totalorder %s19, 1
    %p84 = por %p82, %p83
    %p86 = scmp.ne.s32.totalorder %s69, %s85
    %p87 = scmp.eq.s32.totalorder %s19, 0
    %p88 = por %p86, %p87
    %s90 = sadd.s32 %s89, 1
    %p93 = scmp.eq.s32.totalorder %s13, 1
    %p94 = scmp.ne.s32.totalorder %s89, %s91
    %p95 = scmp.eq.s32.totalorder %s13, 0
    %p96 = por %p94, %p95
    %p97 = scmp.ne.s32.totalorder %s89, %s91
    %p98 = scmp.eq.s32.totalorder %s18, 1
    %p99 = por %p97, %p98
    %p100 = scmp.ne.s32.totalorder %s91, %s92
    %p101 = scmp.eq.s32.totalorder %s18, 0
    %p102 = por %p100, %p101
    %p103 = scmp.ne.s32.totalorder %s91, %s92
    %p104 = scmp.eq.s32.totalorder %s19, 1
    %p105 = por %p103, %p104
    %p107 = scmp.ne.s32.totalorder %s92, %s106
    %p108 = scmp.eq.s32.totalorder %s19, 0
    %p109 = por %p107, %p108
    %s111 = sadd.s32 %s110, 1
    %p114 = scmp.eq.s32.totalorder %s13, 1
    %p115 = scmp.ne.s32.totalorder %s110, %s112
    %p116 = scmp.eq.s32.totalorder %s13, 0
    %p117 = por %p115, %p116
    %p118 = scmp.ne.s32.totalorder %s110, %s112
    %p119 = scmp.eq.s32.totalorder %s18, 1
    %p120 = por %p118, %p119
    %p121 = scmp.ne.s32.totalorder %s112, %s113
    %p122 = scmp.eq.s32.totalorder %s18, 0
    %p123 = por %p121, %p122
    %p124 = scmp.ne.s32.totalorder %s112, %s113
    %p125 = scmp.eq.s32.totalorder %s19, 1
    %p126 = por %p124, %p125
    %p128 = scmp.ne.s32.totalorder %s113, %s127
    %p129 = scmp.eq.s32.totalorder %s19, 0
    %p130 = por %p128, %p129
    %s132 = sadd.s32 %s131, 1
    %p135 = scmp.eq.s32.totalorder %s13, 1
    %p136 = scmp.ne.s32.totalorder %s131, %s133
    %p137 = scmp.eq.s32.totalorder %s13, 0
    %p138 = por %p136, %p137
    %p139 = scmp.ne.s32.totalorder %s131, %s133
    %p140 = scmp.eq.s32.totalorder %s18, 1
    %p141 = por %p139, %p140
    %p142 = scmp.ne.s32.totalorder %s133, %s134
    %p143 = scmp.eq.s32.totalorder %s18, 0
    %p144 = por %p142, %p143
    %p145 = scmp.ne.s32.totalorder %s133, %s134
    %p146 = scmp.eq.s32.totalorder %s19, 1
    %p147 = por %p145, %p146
    %p149 = scmp.ne.s32.totalorder %s134, %s148
    %p150 = scmp.eq.s32.totalorder %s19, 0
    %p151 = por %p149, %p150
    %s153 = sadd.s32 %s152, 1
    %p156 = scmp.eq.s32.totalorder %s13, 1
    %p157 = scmp.ne.s32.totalorder %s152, %s154
    %p158 = scmp.eq.s32.totalorder %s13, 0
    %p159 = por %p157, %p158
    %p160 = scmp.ne.s32.totalorder %s152, %s154
    %p161 = scmp.eq.s32.totalorder %s18, 1
    %p162 = por %p160, %p161
    %p163 = scmp.ne.s32.totalorder %s154, %s155
    %p164 = scmp.eq.s32.totalorder %s18, 0
    %p165 = por %p163, %p164
    %p166 = scmp.ne.s32.totalorder %s154, %s155
    %p167 = scmp.eq.s32.totalorder %s19, 1
    %p168 = por %p166, %p167
    %p170 = scmp.ne.s32.totalorder %s155, %s169
    %p171 = scmp.eq.s32.totalorder %s19, 0
    %p172 = por %p170, %p171
    %s173 = ssub.s32 %s20, %s32
    %s174 = ssub.s32 %s21, %s28
    %s175 = sor.u32 %s173, %s174
    %p176 = scmp.eq.s32.totalorder %s175, 0
    %s178 = sadd.s32 %s177, 1
    %s179 = scalar_select %p176, %s177, %s178
    %p182 = pneg %p176
    %p183 = scmp.eq.s32.totalorder %s13, 1
    %p184 = por %p182, %p183
    %p185 = scmp.ne.s32.totalorder %s177, %s180
    %p186 = scmp.eq.s32.totalorder %s13, 0
    %p187 = por %p185, %p186
    %p188 = scmp.ne.s32.totalorder %s177, %s180
    %p189 = scmp.eq.s32.totalorder %s18, 1
    %p190 = por %p188, %p189
    %p191 = scmp.ne.s32.totalorder %s180, %s181
    %p192 = scmp.eq.s32.totalorder %s18, 0
    %p193 = por %p191, %p192
    %p194 = scmp.ne.s32.totalorder %s180, %s181
    %p195 = scmp.eq.s32.totalorder %s19, 1
    %p196 = por %p194, %p195
    %p198 = scmp.ne.s32.totalorder %s181, %s197
    %p199 = scmp.eq.s32.totalorder %s19, 0
    %p200 = por %p198, %p199
    %p201 = scmp.le.s32.totalorder 1, %s13
    %p202 = scmp.lt.s32.totalorder %s13, 3
    %p203 = pnand %p201, %p202
    %p204 = pneg %p203
    // Predicated region
    $region9: #{attention_gate.1} parent=5 // pred_check
      _
    $region10: #{attention_gate.1} parent=5 // pred_check_branch
      %206 = sbr.rel (%p203) target = $region12
    $region11: #{attention_gate.1} parent=5 // pred_region
      %s207 = ssub.s32 %s13, 1
      // Predicated region
      $region13: #{attention_gate.1} parent=11 // pred_check
        %p208 = pneg %p102
      $region14: #{attention_gate.1} parent=11 // pred_check_branch
        %210 = sbr.rel (%p208) target = $region16
      $region15: #{attention_gate.1} parent=11 // pred_region
        _
      $region16: #{attention_gate.1} parent=11 // pred_fallthru
        _
      // Predicated region
      $region17: #{attention_gate.1} parent=11 // pred_check
        %p211 = pneg %p123
      $region18: #{attention_gate.1} parent=11 // pred_check_branch
        %213 = sbr.rel (%p211) target = $region20
      $region19: #{attention_gate.1} parent=11 // pred_region
        _
      $region20: #{attention_gate.1} parent=11 // pred_fallthru
        _
      // Predicated region
      $region21: #{attention_gate.1} parent=11 // pred_check
        %p214 = pneg %p144
      $region22: #{attention_gate.1} parent=11 // pred_check_branch
        %216 = sbr.rel (%p214) target = $region24
      $region23: #{attention_gate.1} parent=11 // pred_region
        _
      $region24: #{attention_gate.1} parent=11 // pred_fallthru
        _
      // Predicated region
      $region25: #{attention_gate.1} parent=11 // pred_check
        %p217 = pneg %p165
      $region26: #{attention_gate.1} parent=11 // pred_check_branch
        %219 = sbr.rel (%p217) target = $region28
      $region27: #{attention_gate.1} parent=11 // pred_region
        _
      $region28: #{attention_gate.1} parent=11 // pred_fallthru
        _
    $region12: #{attention_gate.1} parent=5 // pred_fallthru
      _
    %p220 = scmp.lt.s32.totalorder %s13, 2
    // Predicated region
    $region29: #{attention_gate.1} parent=5 // pred_check
      %p221 = pneg %p220
    $region30: #{attention_gate.1} parent=5 // pred_check_branch
      %223 = sbr.rel (%p221) target = $region32
    $region31: #{attention_gate.1} parent=5 // pred_region
      // Predicated region
      $region33: #{attention_gate.1} parent=31 // pred_check
        %p224 = pneg %p47
      $region34: #{attention_gate.1} parent=31 // pred_check_branch
        %226 = sbr.rel (%p224) target = $region36
      $region35: #{attention_gate.1} parent=31 // pred_region
        %s227 = smul.u32 2, %s21
        %p228 = scmp.lt.s32.totalorder %s20, 1
        %s229 = scalar_select %p228, %s20, 1
        %p230 = scmp.lt.s32.totalorder %s227, 1
        %s231 = scalar_select %p230, %s227, 1
        %s232 = smul.addr %s229, 2
        %s233 = sadd.s32 %s231, %s232
        %s234 = smul.addr %s233, 4
        %s235 = scalar_lea.vmem %s0, %s234
        %s236 = smul.u32 2, %s21
      $region36: #{attention_gate.1} parent=31 // pred_fallthru
        _
      // Predicated region
      $region37: #{attention_gate.1} parent=31 // pred_check
        %p237 = pneg %p75
      $region38: #{attention_gate.1} parent=31 // pred_check_branch
        %239 = sbr.rel (%p237) target = $region40
      $region39: #{attention_gate.1} parent=31 // pred_region
        %s240 = smul.u32 2, %s21
        %p241 = scmp.lt.s32.totalorder %s20, 1
        %s242 = scalar_select %p241, %s20, 1
        %p243 = scmp.lt.s32.totalorder %s240, 1
        %s244 = scalar_select %p243, %s240, 1
        %s245 = smul.addr %s242, 2
        %s246 = sadd.s32 %s244, %s245
        %s247 = smul.addr %s246, 4
        %s248 = scalar_lea.vmem %s1, %s247
        %s249 = smul.u32 2, %s21
      $region40: #{attention_gate.1} parent=31 // pred_fallthru
        _
    $region32: #{attention_gate.1} parent=5 // pred_fallthru
      _
    %p250 = scmp.le.s32.totalorder 1, %s13
    %p251 = scmp.lt.s32.totalorder %s13, 3
    %p252 = pnand %p250, %p251
    %p253 = pneg %p252
    // Predicated region
    $region41: #{attention_gate.1} parent=5 // pred_check
      _
    $region42: #{attention_gate.1} parent=5 // pred_check_branch
      %255 = sbr.rel (%p252) target = $region44
    $region43: #{attention_gate.1} parent=5 // pred_region
      %s256 = ssub.s32 %s13, 1
      %s257 = smul.u32 2, %s23
      %p258 = scmp.lt.s32.totalorder %s22, 1
      %s259 = scalar_select %p258, %s22, 1
      %p260 = scmp.lt.s32.totalorder %s257, 1
      %s261 = scalar_select %p260, %s257, 1
      %s262 = smul.addr %s259, 2
      %s263 = sadd.s32 %s261, %s262
      %s264 = smul.addr %s263, 4
      %s265 = scalar_lea.vmem %s0, %s264
      %p266 = pneg %p53
      %p267 = pneg %p50
      %s268 = smul.u32 2, %s23
      %p269 = scmp.lt.s32.totalorder %s22, 1
      %s270 = scalar_select %p269, %s22, 1
      %p271 = scmp.lt.s32.totalorder %s268, 1
      %s272 = scalar_select %p271, %s268, 1
      %s273 = smul.addr %s270, 2
      %s274 = sadd.s32 %s272, %s273
      %s275 = smul.addr %s274, 4
      %s276 = scalar_lea.vmem %s1, %s275
      %p277 = pneg %p81
      %p278 = pneg %p78
      %p279 = pneg %p102
      %p280 = pneg %p99
      %p281 = pneg %p123
      %p282 = pneg %p120
      %p283 = pneg %p144
      %p284 = pneg %p141
      %p285 = pneg %p165
      %p286 = pneg %p162
      %p287 = pneg %p193
      %p288 = pneg %p190
      %s289 = smul.u32 2, %s23
      %p290 = scmp.lt.s32.totalorder %s22, 1
      %s291 = scalar_select %p290, %s22, 1
      %p292 = scmp.lt.s32.totalorder %s289, 1
      %s293 = scalar_select %p292, %s289, 1
      %s294 = smul.addr %s291, 2
      %s295 = sadd.s32 %s293, %s294
      %s296 = smul.addr %s295, 4
      %s297 = scalar_lea.vmem %s6, %s296
      %s298 = smul.u32 2, %s23
      %p299 = scmp.lt.s32.totalorder %s22, 1
      %s300 = scalar_select %p299, %s22, 1
      %p301 = scmp.lt.s32.totalorder %s298, 1
      %s302 = scalar_select %p301, %s298, 1
      %s303 = smul.addr %s300, 2
      %s304 = sadd.s32 %s302, %s303
      %s305 = smul.addr %s304, 4
      %s306 = scalar_lea.vmem %s0, %s305
      %s307 = smul.u32 2, %s23
      %s308 = smul.u32 2, %s23
      %p309 = scmp.lt.s32.totalorder %s22, 1
      %s310 = scalar_select %p309, %s22, 1
      %p311 = scmp.lt.s32.totalorder %s308, 1
      %s312 = scalar_select %p311, %s308, 1
      %s313 = smul.addr %s310, 2
      %s314 = sadd.s32 %s312, %s313
      %s315 = smul.addr %s314, 4
      %s316 = scalar_lea.vmem %s1, %s315
      %s317 = smul.u32 2, %s23
      %s318 = smul.u32 2, %s23
      %p319 = scmp.lt.s32.totalorder %s22, 1
      %s320 = scalar_select %p319, %s22, 1
      %p321 = scmp.lt.s32.totalorder %s318, 1
      %s322 = scalar_select %p321, %s318, 1
      %s323 = smul.addr %s320, 2
      %s324 = sadd.s32 %s322, %s323
      %s325 = smul.addr %s324, 4
      %s326 = scalar_lea.vmem %s6, %s325
      %s327 = smul.u32 2, %s23
      %v328 = vld [vmem:[%s306] sm:$0xff]
      %v329 = vld [vmem:[%s316] sm:$0xff]
      %v330 = vld [vmem:[%s2] sm:$0xff]
      %v331 = vld [vmem:[%s3] sm:$0xff]
      %v333 = vcombine.high %v329, %v329
      %vm334 = vcmask 31744
      %v336 = vsel %vm334, %v331, 0
      %vm338 = vcmask 1043456
      %v339 = vsel %vm338, %v329, 0
      %v341 = vsel %vm338, %v333, 0
      %343 = vmatprep.subr.mxu0 %v341
      %344 = vmatpush1.msra.mxu0 %v339
      %345 = vmatprep.subr.mxu0 0.0
      %346 = vmatpush1.msra.mxu0 0.0
      %347 = vmatprep.subr.mxu0 0.0
      %348 = vmatpush1.msra.mxu0 0.0
      %349 = vmatprep.subr.mxu0 0.0
      %350 = vmatpush1.msra.mxu0 0.0
      %351 = vmatprep.subr.mxu0 0.0
      %352 = vmatpush1.msra.mxu0 0.0
      %353 = vmatprep.subr.mxu0 0.0
      %354 = vmatpush1.msra.mxu0 0.0
      %355 = vmatprep.subr.mxu0 0.0
      %356 = vmatpush1.msra.mxu0 0.0
      %357 = vmatprep.subr.mxu0 0.0
      %358 = vmatpush1.msra.mxu0 0.0
      %359 = vmatprep.subr.mxu0 0.0
      %360 = vmatpush1.msra.mxu0 0.0
      %361 = vmatprep.subr.mxu0 0.0
      %362 = vmatpush1.msra.mxu0 0.0
      %363 = vmatprep.subr.mxu0 0.0
      %364 = vmatpush1.msra.mxu0 0.0
      %365 = vmatprep.subr.mxu0 0.0
      %366 = vmatpush1.msra.mxu0 0.0
      %367 = vmatprep.subr.mxu0 0.0
      %368 = vmatpush1.msra.mxu0 0.0
      %369 = vmatprep.subr.mxu0 0.0
      %370 = vmatpush1.msra.mxu0 0.0
      %371 = vmatprep.subr.mxu0 0.0
      %372 = vmatpush1.msra.mxu0 0.0
      %373 = vmatprep.subr.mxu0 0.0
      %374 = vmatpush1.msra.mxu0 0.0
      %375 = vmatprep.subr.mxu0 0.0
      %376 = vmatpush1.msra.mxu0 0.0
      %377 = vmatprep.subr.mxu0 0.0
      %378 = vmatpush1.msra.mxu0 0.0
      %379 = vmatprep.subr.mxu0 0.0
      %380 = vmatpush1.msra.mxu0 0.0
      %381 = vmatprep.subr.mxu0 0.0
      %382 = vmatpush1.msra.mxu0 0.0
      %383 = vmatprep.subr.mxu0 0.0
      %384 = vmatpush1.msra.mxu0 0.0
      %385 = vmatprep.subr.mxu0 0.0
      %386 = vmatpush1.msra.mxu0 0.0
      %387 = vmatprep.subr.mxu0 0.0
      %388 = vmatpush1.msra.mxu0 0.0
      %389 = vmatprep.subr.mxu0 0.0
      %390 = vmatpush1.msra.mxu0 0.0
      %391 = vmatprep.subr.mxu0 0.0
      %392 = vmatpush1.msra.mxu0 0.0
      %393 = vmatprep.subr.mxu0 0.0
      %394 = vmatpush1.msra.mxu0 0.0
      %395 = vmatprep.subr.mxu0 0.0
      %396 = vmatpush1.msra.mxu0 0.0
      %397 = vmatprep.subr.mxu0 0.0
      %398 = vmatpush1.msra.mxu0 0.0
      %399 = vmatprep.subr.mxu0 0.0
      %400 = vmatpush1.msra.mxu0 0.0
      %401 = vmatprep.subr.mxu0 0.0
      %402 = vmatpush1.msra.mxu0 0.0
      %403 = vmatprep.subr.mxu0 0.0
      %404 = vmatpush1.msra.mxu0 0.0
      %405 = vmatprep.subr.mxu0 0.0
      %406 = vmatpush1.msra.mxu0 0.0
      %407 = vmatprep.mubr.f32.mxu0 0.0
      %408 = vmatmul.mubr.f32.gmra.mrb[0].mxu0 %v336
      %v409 = vpop.f32.mrb[0].mxu0
      %v410 = vadd.f32 0.0, %v409
      %v411 = vpop.f32.mrb[0].mxu0
      %v412 = vadd.f32 0.0, %v411
      %413 = vdwg.mxu0
      %v415 = vcombine.high %v328, %v328
      %v417 = vsel %vm334, %v330, 0
      %v419 = vsel %vm338, %v328, 0
      %v421 = vsel %vm338, %v415, 0
      %423 = vmatprep.subr.mxu0 %v421
      %424 = vmatpush1.msra.mxu0 %v419
      %425 = vmatprep.subr.mxu0 0.0
      %426 = vmatpush1.msra.mxu0 0.0
      %427 = vmatprep.subr.mxu0 0.0
      %428 = vmatpush1.msra.mxu0 0.0
      %429 = vmatprep.subr.mxu0 0.0
      %430 = vmatpush1.msra.mxu0 0.0
      %431 = vmatprep.subr.mxu0 0.0
      %432 = vmatpush1.msra.mxu0 0.0
      %433 = vmatprep.subr.mxu0 0.0
      %434 = vmatpush1.msra.mxu0 0.0
      %435 = vmatprep.subr.mxu0 0.0
      %436 = vmatpush1.msra.mxu0 0.0
      %437 = vmatprep.subr.mxu0 0.0
      %438 = vmatpush1.msra.mxu0 0.0
      %439 = vmatprep.subr.mxu0 0.0
      %440 = vmatpush1.msra.mxu0 0.0
      %441 = vmatprep.subr.mxu0 0.0
      %442 = vmatpush1.msra.mxu0 0.0
      %443 = vmatprep.subr.mxu0 0.0
      %444 = vmatpush1.msra.mxu0 0.0
      %445 = vmatprep.subr.mxu0 0.0
      %446 = vmatpush1.msra.mxu0 0.0
      %447 = vmatprep.subr.mxu0 0.0
      %448 = vmatpush1.msra.mxu0 0.0
      %449 = vmatprep.subr.mxu0 0.0
      %450 = vmatpush1.msra.mxu0 0.0
      %451 = vmatprep.subr.mxu0 0.0
      %452 = vmatpush1.msra.mxu0 0.0
      %453 = vmatprep.subr.mxu0 0.0
      %454 = vmatpush1.msra.mxu0 0.0
      %455 = vmatprep.subr.mxu0 0.0
      %456 = vmatpush1.msra.mxu0 0.0
      %457 = vmatprep.subr.mxu0 0.0
      %458 = vmatpush1.msra.mxu0 0.0
      %459 = vmatprep.subr.mxu0 0.0
      %460 = vmatpush1.msra.mxu0 0.0
      %461 = vmatprep.subr.mxu0 0.0
      %462 = vmatpush1.msra.mxu0 0.0
      %463 = vmatprep.subr.mxu0 0.0
      %464 = vmatpush1.msra.mxu0 0.0
      %465 = vmatprep.subr.mxu0 0.0
      %466 = vmatpush1.msra.mxu0 0.0
      %467 = vmatprep.subr.mxu0 0.0
      %468 = vmatpush1.msra.mxu0 0.0
      %469 = vmatprep.subr.mxu0 0.0
      %470 = vmatpush1.msra.mxu0 0.0
      %471 = vmatprep.subr.mxu0 0.0
      %472 = vmatpush1.msra.mxu0 0.0
      %473 = vmatprep.subr.mxu0 0.0
      %474 = vmatpush1.msra.mxu0 0.0
      %475 = vmatprep.subr.mxu0 0.0
      %476 = vmatpush1.msra.mxu0 0.0
      %477 = vmatprep.subr.mxu0 0.0
      %478 = vmatpush1.msra.mxu0 0.0
      %479 = vmatprep.subr.mxu0 0.0
      %480 = vmatpush1.msra.mxu0 0.0
      %481 = vmatprep.subr.mxu0 0.0
      %482 = vmatpush1.msra.mxu0 0.0
      %483 = vmatprep.subr.mxu0 0.0
      %484 = vmatpush1.msra.mxu0 0.0
      %485 = vmatprep.subr.mxu0 0.0
      %486 = vmatpush1.msra.mxu0 0.0
      %487 = vmatprep.mubr.f32.mxu0 0.0
      %488 = vmatmul.mubr.f32.gmra.mrb[0].mxu0 %v417
      %v489 = vpop.f32.mrb[0].mxu0
      %v490 = vadd.f32 %v410, %v489
      %v491 = vpop.f32.mrb[0].mxu0
      %v492 = vadd.f32 %v412, %v491
      %493 = vdwg.mxu0
      %v494 = vld [vmem:[%s4] sm:$0xff]
      %496 = vset.pattern.permute.xlu0 0
      %497 = vperm.xlu0 %496, %v494
      %v498 = vpop.permute.xlu0 %497
      %v500 = vmul.f32 %v490, %v498
      %v501 = vmul.f32 %v492, %v498
      %v502 = vrot.slane %v500, 4
      %v503 = vadd.f32 %v500, %v502
      %v504 = vrot.slane %v503, 2
      %v505 = vadd.f32 %v503, %v504
      %v506 = vrot.slane %v505, 1
      %v507 = vadd.f32 %v505, %v506
      %v508 = vrot.slane %v501, 4
      %v509 = vadd.f32 %v501, %v508
      %v510 = vrot.slane %v509, 2
      %v511 = vadd.f32 %v509, %v510
      %v512 = vrot.slane %v511, 1
      %v513 = vadd.f32 %v511, %v512
      %s514 = sld [smem:[#allocation2]]
      %v515 = vstv %s514
      %v516 = vadd.f32 %v507, %v515
      %v517 = vadd.f32 %v513, %v515
      %v518 = vxor.u32 %v516, 2147483648
      %v519 = vxor.u32 %v517, 2147483648
      %v520 = vmul.f32 %v518, 1.442695
      %v521 = vpow.pop %v520
      %v522 = vmul.f32 %v519, 1.442695
      %v523 = vpow.pop %v522
      %v524 = vadd.f32 %v521, 1.0
      %v525 = vadd.f32 %v523, 1.0
      %v526 = vrcp.pop %v524
      %v527 = vmul.f32 1.0, %v526
      %v528 = vrcp.pop %v525
      %v529 = vmul.f32 1.0, %v528
      %v532 = vcombine.low %v527, %v529
      %v534 = vmul.f32 %v329, %v532
      %535 = vst [vmem:[%s326] sm:$0xff] %v534
      %s536 = smul.u32 2, %s23
      %p537 = scmp.lt.s32.totalorder %s22, 1
      %s538 = scalar_select %p537, %s22, 1
      %p539 = scmp.lt.s32.totalorder %s536, 1
      %s540 = scalar_select %p539, %s536, 1
      %s541 = smul.addr %s538, 2
      %s542 = sadd.s32 %s540, %s541
      %s543 = smul.addr %s542, 4
      %s544 = scalar_lea.vmem %s6, %s543
      // Predicated region
      $region45: #{attention_gate.1} parent=43 // pred_check
        %p545 = pneg %p190
      $region46: #{attention_gate.1} parent=43 // pred_check_branch
        %547 = sbr.rel (%p545) target = $region48
      $region47: #{attention_gate.1} parent=43 // pred_region
        %s548 = smul.u32 2, %s23
      $region48: #{attention_gate.1} parent=43 // pred_fallthru
        _
    $region44: #{attention_gate.1} parent=5 // pred_fallthru
      _
    %p549 = scmp.le.s32.totalorder 2, %s13
    // Predicated region
    $region49: #{attention_gate.1} parent=5 // pred_check
      %p550 = pneg %p549
    $region50: #{attention_gate.1} parent=5 // pred_check_branch
      %552 = sbr.rel (%p550) target = $region52
    $region51: #{attention_gate.1} parent=5 // pred_region
      %s553 = ssub.s32 %s13, 2
      // Predicated region
      $region53: #{attention_gate.1} parent=51 // pred_check
        %p554 = pneg %p196
      $region54: #{attention_gate.1} parent=51 // pred_check_branch
        %556 = sbr.rel (%p554) target = $region56
      $region55: #{attention_gate.1} parent=51 // pred_region
        %s557 = smul.u32 2, %s25
        %p558 = scmp.lt.s32.totalorder %s24, 1
        %s559 = scalar_select %p558, %s24, 1
        %p560 = scmp.lt.s32.totalorder %s557, 1
        %s561 = scalar_select %p560, %s557, 1
        %s562 = smul.addr %s559, 2
        %s563 = sadd.s32 %s561, %s562
        %s564 = smul.addr %s563, 4
        %s565 = scalar_lea.vmem %s6, %s564
      $region56: #{attention_gate.1} parent=51 // pred_fallthru
        _
    $region52: #{attention_gate.1} parent=5 // pred_fallthru
      _
  $region6: #{attention_gate.1} parent=0 // loop_footer
    %s17 = sadd.s32 1, %s13
  $region7: #{attention_gate.1} parent=0 // loop_footer_branch
    %12 = sbr.rel target = $region3
  $region8: #{attention_gate.1} parent=0 // loop_exit
    _

</llo_original>
